<compile_context>
chip_gen: v5e
topology: v5e:2x2
jax: 0.10.0
libtpu: 0.0.40
codegen_flags: <defaults>
</compile_context>

<pallas_src>
import math

import jax
import jax.numpy as jnp
from jax.experimental import pallas as pl
from jax.experimental.pallas import tpu as pltpu


def _round_up(a, m):
    return ((a + m - 1) // m) * m


def linear_kernel(x_ref, w_ref, b_ref, o_ref, acc_ref):
    k = pl.program_id(1)

    @pl.when(k == 0)
    def _():
        acc_ref[...] = jnp.zeros_like(acc_ref)

    # Canonical [tm, tk] x [tk, C_pad] MXU matmul with f32 accumulation.
    acc_ref[...] += jnp.dot(x_ref[...], w_ref[...],
                            preferred_element_type=jnp.float32)

    @pl.when(k == pl.num_programs(1) - 1)
    def _():
        # Fused f32 bias epilogue; lane-dense (C_pad % 128 == 0) unmasked store.
        o_ref[...] = (acc_ref[...] + b_ref[...]).astype(o_ref.dtype)
    # NOTE: LogSoftmax is intentionally NOT applied -- the reference forward()
    # returns raw logits.


def prepare_params(weight, bias, *, param_dtype=jnp.float32):
    """One-time (init/load-time) parameter prep: pad + transpose + optional cast.

    weight: [C, D] (PyTorch nn.Linear layout), bias: [C]
    Returns w_t: [D_pad, C_pad] in param_dtype, b_p: [1, C_pad] in f32.
    Padded weight columns / bias entries are zero -> zero logits, sliced off.
    """
    C, D = weight.shape
    C_pad = max(128, _round_up(C, 128))   # lane-dense output / MXU-aligned N
    D_pad = max(128, _round_up(D, 128))   # K padded so the K grid axis tiles cleanly
    w_t = (jnp.zeros((D_pad, C_pad), jnp.float32)
           .at[:D, :C].set(weight.T.astype(jnp.float32))
           .astype(param_dtype))
    b_p = jnp.zeros((1, C_pad), jnp.float32).at[0, :C].set(bias.astype(jnp.float32))
    return w_t, b_p


def multiclass_forward(x, w_t, b_p, class_count, *, tm=256, tk=512):
    """x: [B, D]; w_t/b_p from prepare_params() -> logits [B, class_count] (f32)."""
    B, D = x.shape
    D_pad, C_pad = w_t.shape
    assert D <= D_pad and class_count <= C_pad

    # --- batch tile: sublane-aligned; for large batches make >=2 parallel grid
    #     steps so both v7x TensorCores get work (no extra steps at tiny B).
    B8 = _round_up(B, 8)
    if B8 <= 16:
        tm = B8
    else:
        tm = min(tm, max(8, _round_up(pl.cdiv(B, 2), 8)))
    B_pad = _round_up(B, tm)

    # --- reduction tile: multiple of 128 that divides D_pad (VMEM use is then
    #     independent of D; default 512 stays well under v5e's 16 MiB scoped VMEM).
    tk = min(tk, D_pad)
    tk = max(128, (tk // 128) * 128)
    while D_pad % tk != 0:
        tk -= 128

    # --- pad activations once per call (padded rows/cols contribute nothing).
    if (B_pad, D_pad) != (B, D):
        x_p = jnp.zeros((B_pad, D_pad), x.dtype).at[:B, :D].set(x)
    else:
        x_p = x
    x_p = x_p.astype(w_t.dtype)   # match streamed weight dtype (bf16 path)

    out = pl.pallas_call(
        linear_kernel,
        out_shape=jax.ShapeDtypeStruct((B_pad, C_pad), jnp.float32),
        grid=(B_pad // tm, D_pad // tk),
        in_specs=[
            pl.BlockSpec((tm, tk), lambda i, k: (i, k)),      # x tile
            pl.BlockSpec((tk, C_pad), lambda i, k: (k, 0)),   # weight tile (pre-transposed)
            pl.BlockSpec((1, C_pad), lambda i, k: (0, 0)),    # bias row (resident)
        ],
        out_specs=pl.BlockSpec((tm, C_pad), lambda i, k: (i, 0)),
        scratch_shapes=[pltpu.VMEM((tm, C_pad), jnp.float32)],
        compiler_params=pltpu.CompilerParams(
            dimension_semantics=("parallel", "arbitrary"),
        ),
    )(x_p, w_t, b_p)

    return out[:B, :class_count]


if __name__ == "__main__":
    # Small shapes implied by the module: x is [batch, input_dim].
    batch, input_dim, class_count = 8, 32, 10

    key = jax.random.PRNGKey(0)
    kx, kw, kb = jax.random.split(key, 3)

    # Deterministic parameter init mirroring nn.Linear's default
    # U(-1/sqrt(in_features), 1/sqrt(in_features)).
    bound = 1.0 / math.sqrt(input_dim)
    weight = jax.random.uniform(kw, (class_count, input_dim), jnp.float32,
                                minval=-bound, maxval=bound)
    bias = jax.random.uniform(kb, (class_count,), jnp.float32,
                              minval=-bound, maxval=bound)
    x = jax.random.normal(kx, (batch, input_dim), jnp.float32)

    ref = x @ weight.T + bias

    # f32 path: exact PyTorch-equivalent semantics.
    w_t, b_p = prepare_params(weight, bias, param_dtype=jnp.float32)
    out = jax.block_until_ready(multiclass_forward(x, w_t, b_p, class_count))
    assert out.shape == (batch, class_count)
    assert jnp.allclose(out, ref, atol=1e-5, rtol=1e-5)

    # bf16 weight/activation streaming path (HBM-bound regime on v5e/v6e/v7x),
    # f32 accumulate + f32 bias epilogue.
    w_t16, b_p16 = prepare_params(weight, bias, param_dtype=jnp.bfloat16)
    out16 = jax.block_until_ready(multiclass_forward(x, w_t16, b_p16, class_count))
    assert jnp.allclose(out16, ref, atol=2e-2, rtol=2e-2)

    print("KERNEL_OK")
</pallas_src>

<mosaic_0001>
module attributes {stable_mosaic.version = 11 : i64} {
  func.func @linear_kernel(%arg0: i32, %arg1: i32, %arg2: memref<8x128xf32, #tpu.memory_space<vmem>>, %arg3: memref<128x128xf32, #tpu.memory_space<vmem>>, %arg4: memref<1x128xf32, #tpu.memory_space<vmem>>, %arg5: memref<8x128xf32, #tpu.memory_space<vmem>>, %arg6: memref<8x128xf32, #tpu.memory_space<vmem>>) attributes {dimension_semantics = [#tpu.dimension_semantics<parallel>, #tpu.dimension_semantics<arbitrary>], iteration_bounds = array<i64: 1, 1>, scalar_prefetch = 0 : i64, scratch_operands = 1 : i64, tpu.core_type = #tpu.core_type<tc>, window_params = [{transform_indices = @transform_0, window_bounds = array<i64: 8, 128>}, {transform_indices = @transform_1, window_bounds = array<i64: 128, 128>}, {pipeline_mode = #tpu.pipeline_mode<synchronous>, transform_indices = @transform_2, window_bounds = array<i64: 1, 128>}, {transform_indices = @transform_3, window_bounds = array<i64: 8, 128>}]} {
    %c0_i32 = arith.constant 0 : i32
    %0 = arith.cmpi eq, %arg1, %c0_i32 : i32
    %1 = arith.extui %0 : i1 to i32
    %c0_i32_0 = arith.constant 0 : i32
    %2 = arith.cmpi ne, %1, %c0_i32_0 : i32
    scf.if %2 {
      %cst_10 = arith.constant 0.000000e+00 : f32
      %12 = vector.broadcast %cst_10 : f32 to vector<8x128xf32>
      %c0_11 = arith.constant 0 : index
      %c0_12 = arith.constant 0 : index
      %13 = vector.load %arg6[%c0_11, %c0_12] : memref<8x128xf32, #tpu.memory_space<vmem>>, vector<8x128xf32>
      tpu.vector_store %arg6[%c0_11, %c0_12], %12 {strides = array<i32>} : memref<8x128xf32, #tpu.memory_space<vmem>>, vector<8x128xf32>,
    } else {
    }
    %c0 = arith.constant 0 : index
    %c0_1 = arith.constant 0 : index
    %3 = vector.load %arg6[%c0, %c0_1] : memref<8x128xf32, #tpu.memory_space<vmem>>, vector<8x128xf32>
    %c0_2 = arith.constant 0 : index
    %c0_3 = arith.constant 0 : index
    %4 = vector.load %arg2[%c0_2, %c0_3] : memref<8x128xf32, #tpu.memory_space<vmem>>, vector<8x128xf32>
    %c0_4 = arith.constant 0 : index
    %c0_5 = arith.constant 0 : index
    %5 = vector.load %arg3[%c0_4, %c0_5] : memref<128x128xf32, #tpu.memory_space<vmem>>, vector<128x128xf32>
    %cst = arith.constant dense<0.000000e+00> : vector<8x128xf32>
    %6 = tpu.matmul %4, %5, %cst {dimension_numbers = #tpu.dot_dimension_numbers<[1], [0], [0], [1], [0, 0, 1, 1], [], []>} : vector<8x128xf32>, vector<128x128xf32>, vector<8x128xf32> -> vector<8x128xf32>
    %7 = arith.addf %3, %6 : vector<8x128xf32>
    %c0_6 = arith.constant 0 : index
    %c0_7 = arith.constant 0 : index
    %8 = vector.load %arg6[%c0_6, %c0_7] : memref<8x128xf32, #tpu.memory_space<vmem>>, vector<8x128xf32>
    tpu.vector_store %arg6[%c0_6, %c0_7], %7 {strides = array<i32>} : memref<8x128xf32, #tpu.memory_space<vmem>>, vector<8x128xf32>,
    %c0_i32_8 = arith.constant 0 : i32
    %9 = arith.cmpi eq, %arg1, %c0_i32_8 : i32
    %10 = arith.extui %9 : i1 to i32
    %c0_i32_9 = arith.constant 0 : i32
    %11 = arith.cmpi ne, %10, %c0_i32_9 : i32
    scf.if %11 {
      %c0_10 = arith.constant 0 : index
      %c0_11 = arith.constant 0 : index
      %12 = vector.load %arg6[%c0_10, %c0_11] : memref<8x128xf32, #tpu.memory_space<vmem>>, vector<8x128xf32>
      %c0_12 = arith.constant 0 : index
      %c0_13 = arith.constant 0 : index
      %13 = vector.load %arg4[%c0_12, %c0_13] : memref<1x128xf32, #tpu.memory_space<vmem>>, vector<1x128xf32>
      %14 = vector.broadcast %13 : vector<1x128xf32> to vector<8x128xf32>
      %15 = arith.addf %12, %14 : vector<8x128xf32>
      %c0_14 = arith.constant 0 : index
      %c0_15 = arith.constant 0 : index
      %16 = vector.load %arg5[%c0_14, %c0_15] : memref<8x128xf32, #tpu.memory_space<vmem>>, vector<8x128xf32>
      tpu.vector_store %arg5[%c0_14, %c0_15], %15 {strides = array<i32>} : memref<8x128xf32, #tpu.memory_space<vmem>>, vector<8x128xf32>,
    } else {
    }
    return
  }
  func.func @transform_0(%arg0: i32, %arg1: i32) -> (i32, i32) {
    %c0_i32 = arith.constant 0 : i32
    return %arg0, %arg1 : i32, i32
  }
  func.func @transform_1(%arg0: i32, %arg1: i32) -> (i32, i32) {
    %c0_i32 = arith.constant 0 : i32
    %c0_i32_0 = arith.constant 0 : i32
    return %arg1, %c0_i32 : i32, i32
  }
  func.func @transform_2(%arg0: i32, %arg1: i32) -> (i32, i32) {
    %c0_i32 = arith.constant 0 : i32
    %c0_i32_0 = arith.constant 0 : i32
    %c0_i32_1 = arith.constant 0 : i32
    return %c0_i32, %c0_i32_0 : i32, i32
  }
  func.func @transform_3(%arg0: i32, %arg1: i32) -> (i32, i32) {
    %c0_i32 = arith.constant 0 : i32
    %c0_i32_0 = arith.constant 0 : i32
    return %arg0, %c0_i32 : i32, i32
  }
}

</mosaic_0001>

<llo_original>
// kernel: tpu_custom_call.1
$region0: #{tpu_custom_call.1}
  #allocation0 [shape = 'u32[]', space=smem, size = 0x4, offset = 0x4, fixed_abs, tag = 'smem constant byte address 0x4 - core index']
  #allocation1 [shape = 'u32[72,128]{1,0:T(1,128)}', space=vmem, size = 0x9000, scoped, tag = 'internal scratch']
  #allocation2 [shape = 'f32[8,128]{1,0:T(8,128)}', space=vmem, size = 0x1000, scoped, tag = 'scratch operand']
  %s0 = inlined_call_operand.hbm [shape: f32[8,128], index: 0, kind: input, shape index: {}]
  %s1 = inlined_call_operand.hbm [shape: f32[128,128], index: 1, kind: input, shape index: {}]
  %s2 = inlined_call_operand.vmem [shape: f32[1,128], index: 2, kind: input, shape index: {}]
  %s3 = inlined_call_operand.hbm [shape: f32[8,128], index: 3, kind: output, shape index: {}]
  %s4 = sld [smem:[#allocation0]]
  $region38: #{tpu_custom_call.1} parent=0
    _
  %s6 = ssub.s32 1, %s4
  %s7 = scalar_select 0, %s6, %s4
  $region1: #{tpu_custom_call.1} parent=0
    #allocation3 [shape = 'u8[4096]{0}', space=vmem, size = 0x1000, scoped, tag = 'input window, operand 0, single buffered']
    #allocation4 [shape = 's32[1]{0}', space=sflag, size = 0x4, scoped, tag = 'scoped memory for tpu_custom_call.1']
    #allocation5 [shape = 's32[1]{0}', space=sflag, size = 0x4, scoped, tag = 'scoped memory for tpu_custom_call.1']
    #allocation6 [shape = 'u8[65536]{0}', space=vmem, size = 0x10000, scoped, tag = 'input window, operand 1, single buffered']
    #allocation7 [shape = 's32[1]{0}', space=sflag, size = 0x4, scoped, tag = 'scoped memory for tpu_custom_call.1']
    #allocation8 [shape = 'u8[4096]{0}', space=vmem, size = 0x1000, scoped, tag = 'output window, operand 0, single buffered']
    %8 = vsyncpa [#allocation4], 0
    %9 = vsyncpa [#allocation7], 0
    %10 = vsyncpa [#allocation5], 0
    // Predicated region
    $region2: #{tpu_custom_call.1} parent=1 // pred_check
      _
    $region3: #{tpu_custom_call.1} parent=1 // pred_check_branch
      %12 = sbr.rel (0) target = $region5
    $region4: #{tpu_custom_call.1} parent=1 // pred_region
      %14 = vsyncadd [#allocation4], 0
      %s16 = sshll.u32 %s0, 4
      %s17 = int_to_ptr.hbm [resolvable:$true] %s16
      %s18 = sshll.u32 [#allocation3], 4
      %s19 = int_to_ptr.vmem [resolvable:$true] %s18
      %21 = dma.hbm_to_vmem [thread:$0]  %s17, 128, %s19, [#allocation4]
    $region5: #{tpu_custom_call.1} parent=1 // pred_fallthru
      _
    // Predicated region
    $region6: #{tpu_custom_call.1} parent=1 // pred_check
      _
    $region7: #{tpu_custom_call.1} parent=1 // pred_check_branch
      %23 = sbr.rel (0) target = $region9
    $region8: #{tpu_custom_call.1} parent=1 // pred_region
      %25 = vsyncadd [#allocation7], 0
      %s26 = sshll.u32 %s1, 4
      %s27 = int_to_ptr.hbm [resolvable:$true] %s26
      %s28 = sshll.u32 [#allocation6], 4
      %s29 = int_to_ptr.vmem [resolvable:$true] %s28
      %34 = dma.hbm_to_vmem [thread:$0]  %s27, 2048, %s29, [#allocation7], 128, 128, 8
    $region9: #{tpu_custom_call.1} parent=1 // pred_fallthru
      _
    // Predicated region
    $region10: #{tpu_custom_call.1} parent=1 // pred_check
      _
    $region11: #{tpu_custom_call.1} parent=1 // pred_check_branch
      %36 = sbr.rel (0) target = $region13
    $region12: #{tpu_custom_call.1} parent=1 // pred_region
      _
    $region13: #{tpu_custom_call.1} parent=1 // pred_fallthru
      _
    // Predicated region
    $region14: #{tpu_custom_call.1} parent=1 // pred_check
      _
    $region15: #{tpu_custom_call.1} parent=1 // pred_check_branch
      %38 = sbr.rel (0) target = $region17
    $region16: #{tpu_custom_call.1} parent=1 // pred_region
      %40 = dma.done [#allocation4], 128
    $region17: #{tpu_custom_call.1} parent=1 // pred_fallthru
      _
    // Predicated region
    $region18: #{tpu_custom_call.1} parent=1 // pred_check
      _
    $region19: #{tpu_custom_call.1} parent=1 // pred_check_branch
      %42 = sbr.rel (0) target = $region21
    $region20: #{tpu_custom_call.1} parent=1 // pred_region
      %44 = dma.done [#allocation7], 2048
    $region21: #{tpu_custom_call.1} parent=1 // pred_fallthru
      _
    %p45 = scmp.eq.s32.totalorder 0, 0
    // Predicated region
    $region22: #{tpu_custom_call.1} parent=1 // pred_check
      %p46 = pneg %p45
    $region23: #{tpu_custom_call.1} parent=1 // pred_check_branch
      %48 = sbr.rel (%p46) target = $region25
    $region24: #{tpu_custom_call.1} parent=1 // pred_region
      %49 = vst [vmem:[#allocation2] sm:$0xff] 0.0
    $region25: #{tpu_custom_call.1} parent=1 // pred_fallthru
      _
    %v50 = vld [vmem:[#allocation2] sm:$0xff]
    %v51 = vld [vmem:[#allocation3] sm:$0xff]
    %v52 = vld [vmem:[#allocation6] sm:$0xff]
    %v53 = vld [vmem:[#allocation6 + $0x8] sm:$0xff]
    %v54 = vld [vmem:[#allocation6 + $0x10] sm:$0xff]
    %v55 = vld [vmem:[#allocation6 + $0x18] sm:$0xff]
    %v56 = vld [vmem:[#allocation6 + $0x20] sm:$0xff]
    %v57 = vld [vmem:[#allocation6 + $0x28] sm:$0xff]
    %v58 = vld [vmem:[#allocation6 + $0x30] sm:$0xff]
    %v59 = vld [vmem:[#allocation6 + $0x38] sm:$0xff]
    %v60 = vld [vmem:[#allocation6 + $0x40] sm:$0xff]
    %v61 = vld [vmem:[#allocation6 + $0x48] sm:$0xff]
    %v62 = vld [vmem:[#allocation6 + $0x50] sm:$0xff]
    %v63 = vld [vmem:[#allocation6 + $0x58] sm:$0xff]
    %v64 = vld [vmem:[#allocation6 + $0x60] sm:$0xff]
    %v65 = vld [vmem:[#allocation6 + $0x68] sm:$0xff]
    %v66 = vld [vmem:[#allocation6 + $0x70] sm:$0xff]
    %v67 = vld [vmem:[#allocation6 + $0x78] sm:$0xff]
    %68 = vmatpush.msra.mxu0 %v67
    %69 = vmatpush.msra.mxu0 %v66
    %70 = vmatpush.msra.mxu0 %v65
    %71 = vmatpush.msra.mxu0 %v64
    %72 = vmatpush.msra.mxu0 %v63
    %73 = vmatpush.msra.mxu0 %v62
    %74 = vmatpush.msra.mxu0 %v61
    %75 = vmatpush.msra.mxu0 %v60
    %76 = vmatpush.msra.mxu0 %v59
    %77 = vmatpush.msra.mxu0 %v58
    %78 = vmatpush.msra.mxu0 %v57
    %79 = vmatpush.msra.mxu0 %v56
    %80 = vmatpush.msra.mxu0 %v55
    %81 = vmatpush.msra.mxu0 %v54
    %82 = vmatpush.msra.mxu0 %v53
    %83 = vmatpush.msra.mxu0 %v52
    %84 = vmatmul.f32.gmra.mxu0 %v51
    %v85 = vpop.f32.mrf.mxu0
    %v86 = vadd.f32 0.0, %v85
    %87 = vdwg.mxu0
    %v88 = vadd.f32 %v50, %v86
    %89 = vst [vmem:[#allocation2] sm:$0xff] %v88
    // Predicated region
    $region26: #{tpu_custom_call.1} parent=1 // pred_check
      %p90 = pneg %p45
    $region27: #{tpu_custom_call.1} parent=1 // pred_check_branch
      %92 = sbr.rel (%p90) target = $region29
    $region28: #{tpu_custom_call.1} parent=1 // pred_region
      %v93 = vld [vmem:[#allocation2] sm:$0xff]
      %v94 = vld [vmem:[%s2] sm:$0x1]
      %v96 = vperm.slane %v94, 0
      %v98 = vadd.f32 %v93, %v96
      %99 = vst [vmem:[#allocation8] sm:$0xff] %v98
    $region29: #{tpu_custom_call.1} parent=1 // pred_fallthru
      _
    // Predicated region
    $region30: #{tpu_custom_call.1} parent=1 // pred_check
      _
    $region31: #{tpu_custom_call.1} parent=1 // pred_check_branch
      %101 = sbr.rel (0) target = $region33
    $region32: #{tpu_custom_call.1} parent=1 // pred_region
      %103 = vsyncadd [#allocation5], 0
      %s105 = sshll.u32 [#allocation8], 4
      %s106 = int_to_ptr.vmem [resolvable:$true] %s105
      %s107 = sshll.u32 %s3, 4
      %s108 = int_to_ptr.hbm [resolvable:$true] %s107
      %110 = dma.vmem_to_hbm [thread:$0]  %s106, 128, %s108, [#allocation5]
    $region33: #{tpu_custom_call.1} parent=1 // pred_fallthru
      _
    // Predicated region
    $region34: #{tpu_custom_call.1} parent=1 // pred_check
      _
    $region35: #{tpu_custom_call.1} parent=1 // pred_check_branch
      %112 = sbr.rel (0) target = $region37
    $region36: #{tpu_custom_call.1} parent=1 // pred_region
      %114 = dma.done [#allocation5], 128
    $region37: #{tpu_custom_call.1} parent=1 // pred_fallthru
      _
    %115 = vsyncpa [#allocation4], 1
    %116 = vsyncpa [#allocation7], 1
    %117 = vsyncpa [#allocation5], 1

</llo_original>
